<compile_context>
chip_gen: v5e
topology: v5e:2x2
jax: 0.10.0
libtpu: 0.0.40
codegen_flags: <defaults>
</compile_context>

<pallas_src>
import jax
import jax.numpy as jnp
from jax.experimental import pallas as pl
from jax.experimental.pallas import tpu as pltpu


def _pick_s_tile(s, c, itemsize, target_bytes):
    """Largest multiple-of-128 divisor of S whose (C, tS) tile fits target_bytes.

    The last dim of a block must be a multiple of 128 or the full extent, so when
    S is not a multiple of 128 we fall back to the full S extent.
    """
    if s % 128 != 0:
        # TODO(synk): pad S to a multiple of 128 in the wrapper if a full-S slab
        # ever exceeds VMEM for a non-128-divisible spatio-temporal size.
        return s
    cap = max(128, (target_bytes // max(1, c * itemsize)) // 128 * 128)
    best = None
    m = 128
    while m <= min(s, cap):
        if s % m == 0:
            best = m
        m += 128
    return best if best is not None else s


def base_head_forward(x_ncthw, weight, bias, *, target_block_bytes=4 * 1024 * 1024):
    """Args:
        x_ncthw: (N, C, T, H, W) float32  (PyTorch NCDHW layout)
        weight:  (num_classes, C) float32 (PyTorch nn.Linear layout, used as-is)
        bias:    (num_classes,)   float32
    Returns:
        (probs, pooled): ((N, num_classes) softmax probs, (N, C) pooled features)
    """
    n, c, t, h, w = x_ncthw.shape
    k = weight.shape[0]
    s = t * h * w

    x_ncs = x_ncthw.reshape(n, c, s)          # free reshape, no transpose / extra HBM pass
    bias_col = bias.reshape(k, 1)

    itemsize = x_ncs.dtype.itemsize
    ts = _pick_s_tile(s, c, itemsize, target_block_bytes)
    n_s = s // ts
    ones_rhs = jnp.ones((ts, 8), dtype=x_ncs.dtype)   # resident MXU pooling RHS
    inv_s = 1.0 / float(s)

    def kernel(x_ref, w_ref, b_ref, ones_ref, out_ref, pooled_ref, acc_ref):
        kk = pl.program_id(1)

        @pl.when(kk == 0)
        def _():
            acc_ref[...] = jnp.zeros_like(acc_ref)

        # MXU pooling: (C, tS) @ (tS, 8) -> (C, 8); every column holds the row-sum.
        acc_ref[...] += jnp.dot(
            x_ref[0], ones_ref[...],
            preferred_element_type=jnp.float32,
            precision=jax.lax.Precision.HIGHEST)

        @pl.when(kk == pl.num_programs(1) - 1)
        def _():
            pooled_col = acc_ref[:, 0:1] * inv_s                      # (C, 1)
            pooled_ref[...] = pooled_col[None].astype(pooled_ref.dtype)

            # TODO(synk): dropout is identity at inference; training-mode dropout
            # is not implemented.
            logits = jnp.dot(w_ref[...], pooled_col,                  # (K, 1)
                             preferred_element_type=jnp.float32,
                             precision=jax.lax.Precision.HIGHEST) + b_ref[...]

            # TODO(synk): only the 'softmax' activation branch of BaseHead is
            # implemented (the 'sigmoid' config option is omitted).
            m = jnp.max(logits, axis=0, keepdims=True)
            e = jnp.exp(logits - m)
            probs = e / jnp.sum(e, axis=0, keepdims=True)
            out_ref[...] = probs[None].astype(out_ref.dtype)

    # VMEM budget: double-buffered x tile + resident weight/bias/ones + accumulator
    # + resident output columns, with generous headroom, clamped below v7x physical.
    tile_bytes = c * ts * itemsize
    est_vmem = (2 * tile_bytes                      # x tile (double-buffered)
                + 2 * ts * 8 * itemsize             # ones RHS
                + 2 * k * c * 4 + 2 * k * 4         # weight + bias
                + c * 8 * 4                         # accumulator scratch
                + 2 * (k + c) * 4)                  # output columns
    vmem_limit = int(min(max(32 * 1024 * 1024, 2 * est_vmem), 48 * 1024 * 1024))

    probs3, pooled3 = pl.pallas_call(
        kernel,
        out_shape=(
            jax.ShapeDtypeStruct((n, k, 1), jnp.float32),
            jax.ShapeDtypeStruct((n, c, 1), jnp.float32),
        ),
        grid_spec=pltpu.PrefetchScalarGridSpec(
            num_scalar_prefetch=0,
            grid=(n, n_s),
            in_specs=[
                pl.BlockSpec((1, c, ts), lambda i, kk: (i, 0, kk)),   # x tile (streamed)
                pl.BlockSpec((k, c), lambda i, kk: (0, 0)),           # weight (resident)
                pl.BlockSpec((k, 1), lambda i, kk: (0, 0)),           # bias   (resident)
                pl.BlockSpec((ts, 8), lambda i, kk: (0, 0)),          # ones   (resident)
            ],
            out_specs=[
                pl.BlockSpec((1, k, 1), lambda i, kk: (i, 0, 0)),     # probs  (revisited over S)
                pl.BlockSpec((1, c, 1), lambda i, kk: (i, 0, 0)),     # pooled (revisited over S)
            ],
            scratch_shapes=[pltpu.VMEM((c, 8), jnp.float32)],         # pooled-sum accumulator
        ),
        compiler_params=pltpu.CompilerParams(
            dimension_semantics=("parallel", "arbitrary"),
            vmem_limit_bytes=vmem_limit),
    )(x_ncs, weight, bias_col, ones_rhs)

    return probs3.reshape(n, k), pooled3.reshape(n, c)


def base_head_reference(x_ncthw, weight, bias):
    """Pure-JAX reference mirroring the PyTorch forward."""
    n = x_ncthw.shape[0]
    pooled = jnp.mean(x_ncthw, axis=(2, 3, 4))              # (N, C)
    logits = pooled @ weight.T + bias                        # (N, K)
    probs = jax.nn.softmax(logits, axis=-1)
    return probs.reshape(n, -1), pooled.reshape(n, -1)


if __name__ == "__main__":
    # small shapes: batch=2, dim (NUM_OUT_FEATURES)=32, T=4, H=8, W=8 (S=256),
    # num_classes=16
    N, C, T, H, W = 2, 32, 4, 8, 8
    NUM_CLASSES = 16

    key = jax.random.PRNGKey(0)
    kx, kw, kb = jax.random.split(key, 3)
    x = jax.random.normal(kx, (N, C, T, H, W), dtype=jnp.float32)
    weight = 0.1 * jax.random.normal(kw, (NUM_CLASSES, C), dtype=jnp.float32)
    bias = 0.01 * jax.random.normal(kb, (NUM_CLASSES,), dtype=jnp.float32)

    # small target block so the demo exercises the multi-tile S accumulation path
    out, pooled = base_head_forward(x, weight, bias, target_block_bytes=16 * 1024)
    out = jax.block_until_ready(out)
    pooled = jax.block_until_ready(pooled)

    ref_out, ref_pooled = base_head_reference(x, weight, bias)
    assert out.shape == (N, NUM_CLASSES) and pooled.shape == (N, C)
    assert jnp.allclose(out, ref_out, atol=1e-5, rtol=1e-5)
    assert jnp.allclose(pooled, ref_pooled, atol=1e-5, rtol=1e-5)

    print("KERNEL_OK")
</pallas_src>

<mosaic_0001>
module attributes {stable_mosaic.version = 11 : i64} {
  func.func @kernel(%arg0: i32, %arg1: i32, %arg2: memref<1x32x128xf32, #tpu.memory_space<vmem>>, %arg3: memref<16x32xf32, #tpu.memory_space<vmem>>, %arg4: memref<16x1xf32, #tpu.memory_space<vmem>>, %arg5: memref<128x8xf32, #tpu.memory_space<vmem>>, %arg6: memref<1x16x1xf32, #tpu.memory_space<vmem>>, %arg7: memref<1x32x1xf32, #tpu.memory_space<vmem>>, %arg8: memref<32x8xf32, #tpu.memory_space<vmem>>) attributes {dimension_semantics = [#tpu.dimension_semantics<parallel>, #tpu.dimension_semantics<arbitrary>], iteration_bounds = array<i64: 2, 2>, scalar_prefetch = 0 : i64, scratch_operands = 1 : i64, tpu.core_type = #tpu.core_type<tc>, window_params = [{transform_indices = @transform_0, window_bounds = array<i64: 1, 32, 128>}, {pipeline_mode = #tpu.pipeline_mode<synchronous>, transform_indices = @transform_1, window_bounds = array<i64: 16, 32>}, {pipeline_mode = #tpu.pipeline_mode<synchronous>, transform_indices = @transform_2, window_bounds = array<i64: 16, 1>}, {pipeline_mode = #tpu.pipeline_mode<synchronous>, transform_indices = @transform_3, window_bounds = array<i64: 128, 8>}, {transform_indices = @transform_4, window_bounds = array<i64: 1, 16, 1>}, {transform_indices = @transform_5, window_bounds = array<i64: 1, 32, 1>}]} {
    %c0_i32 = arith.constant 0 : i32
    %0 = arith.cmpi eq, %arg1, %c0_i32 : i32
    %1 = arith.extui %0 : i1 to i32
    %c0_i32_0 = arith.constant 0 : i32
    %2 = arith.cmpi ne, %1, %c0_i32_0 : i32
    scf.if %2 {
      %cst_10 = arith.constant 0.000000e+00 : f32
      %13 = vector.broadcast %cst_10 : f32 to vector<32x8xf32>
      %c0_11 = arith.constant 0 : index
      %c0_12 = arith.constant 0 : index
      %14 = vector.load %arg8[%c0_11, %c0_12] : memref<32x8xf32, #tpu.memory_space<vmem>>, vector<32x8xf32>
      tpu.vector_store %arg8[%c0_11, %c0_12], %13 {strides = array<i32>} : memref<32x8xf32, #tpu.memory_space<vmem>>, vector<32x8xf32>,
    } else {
    }
    %c0 = arith.constant 0 : index
    %c0_1 = arith.constant 0 : index
    %3 = vector.load %arg8[%c0, %c0_1] : memref<32x8xf32, #tpu.memory_space<vmem>>, vector<32x8xf32>
    %c0_2 = arith.constant 0 : index
    %c0_3 = arith.constant 0 : index
    %c0_4 = arith.constant 0 : index
    %4 = vector.load %arg2[%c0_2, %c0_3, %c0_4] : memref<1x32x128xf32, #tpu.memory_space<vmem>>, vector<1x32x128xf32>
    %5 = vector.shape_cast %4 : vector<1x32x128xf32> to vector<32x128xf32>
    %c0_5 = arith.constant 0 : index
    %c0_6 = arith.constant 0 : index
    %6 = vector.load %arg5[%c0_5, %c0_6] : memref<128x8xf32, #tpu.memory_space<vmem>>, vector<128x8xf32>
    %cst = arith.constant dense<0.000000e+00> : vector<32x8xf32>
    %7 = tpu.matmul %5, %6, %cst {dimension_numbers = #tpu.dot_dimension_numbers<[1], [0], [0], [1], [0, 0, 1, 1], [], []>, precision = #tpu.contract_precision<fp32>} : vector<32x128xf32>, vector<128x8xf32>, vector<32x8xf32> -> vector<32x8xf32>
    %8 = arith.addf %3, %7 : vector<32x8xf32>
    %c0_7 = arith.constant 0 : index
    %c0_8 = arith.constant 0 : index
    %9 = vector.load %arg8[%c0_7, %c0_8] : memref<32x8xf32, #tpu.memory_space<vmem>>, vector<32x8xf32>
    tpu.vector_store %arg8[%c0_7, %c0_8], %8 {strides = array<i32>} : memref<32x8xf32, #tpu.memory_space<vmem>>, vector<32x8xf32>,
    %c1_i32 = arith.constant 1 : i32
    %10 = arith.cmpi eq, %arg1, %c1_i32 : i32
    %11 = arith.extui %10 : i1 to i32
    %c0_i32_9 = arith.constant 0 : i32
    %12 = arith.cmpi ne, %11, %c0_i32_9 : i32
    scf.if %12 {
      %c0_10 = arith.constant 0 : index
      %c0_11 = arith.constant 0 : index
      %13 = vector.load %arg8[%c0_10, %c0_11] : memref<32x8xf32, #tpu.memory_space<vmem>>, vector<32x1xf32>
      %cst_12 = arith.constant 3.906250e-03 : f32
      %14 = vector.broadcast %cst_12 : f32 to vector<32x1xf32>
      %15 = arith.mulf %13, %14 : vector<32x1xf32>
      %16 = vector.shape_cast %15 : vector<32x1xf32> to vector<1x32x1xf32>
      %c0_13 = arith.constant 0 : index
      %c0_14 = arith.constant 0 : index
      %c0_15 = arith.constant 0 : index
      %17 = vector.load %arg7[%c0_13, %c0_14, %c0_15] : memref<1x32x1xf32, #tpu.memory_space<vmem>>, vector<1x32x1xf32>
      tpu.vector_store %arg7[%c0_13, %c0_14, %c0_15], %16 {strides = array<i32>} : memref<1x32x1xf32, #tpu.memory_space<vmem>>, vector<1x32x1xf32>,
      %c0_16 = arith.constant 0 : index
      %c0_17 = arith.constant 0 : index
      %18 = vector.load %arg3[%c0_16, %c0_17] : memref<16x32xf32, #tpu.memory_space<vmem>>, vector<16x32xf32>
      %cst_18 = arith.constant dense<0.000000e+00> : vector<16x1xf32>
      %19 = tpu.matmul %18, %15, %cst_18 {dimension_numbers = #tpu.dot_dimension_numbers<[1], [0], [0], [1], [0, 0, 1, 1], [], []>, precision = #tpu.contract_precision<fp32>} : vector<16x32xf32>, vector<32x1xf32>, vector<16x1xf32> -> vector<16x1xf32>
      %c0_19 = arith.constant 0 : index
      %c0_20 = arith.constant 0 : index
      %20 = vector.load %arg4[%c0_19, %c0_20] : memref<16x1xf32, #tpu.memory_space<vmem>>, vector<16x1xf32>
      %21 = arith.addf %19, %20 : vector<16x1xf32>
      %cst_21 = arith.constant dense<0xFF800000> : vector<1xf32>
      %22 = vector.multi_reduction <maximumf>, %21, %cst_21 [0] : vector<16x1xf32> to vector<1xf32>
      %23 = vector.shape_cast %22 : vector<1xf32> to vector<1x1xf32>
      %24 = vector.broadcast %23 : vector<1x1xf32> to vector<16x1xf32>
      %25 = arith.subf %21, %24 : vector<16x1xf32>
      %26 = math.exp %25 : vector<16x1xf32>
      %cst_22 = arith.constant dense<0.000000e+00> : vector<1xf32>
      %27 = vector.multi_reduction <add>, %26, %cst_22 [0] : vector<16x1xf32> to vector<1xf32>
      %28 = vector.shape_cast %27 : vector<1xf32> to vector<1x1xf32>
      %29 = vector.broadcast %28 : vector<1x1xf32> to vector<16x1xf32>
      %30 = arith.divf %26, %29 : vector<16x1xf32>
      %31 = vector.shape_cast %30 : vector<16x1xf32> to vector<1x16x1xf32>
      %c0_23 = arith.constant 0 : index
      %c0_24 = arith.constant 0 : index
      %c0_25 = arith.constant 0 : index
      %32 = vector.load %arg6[%c0_23, %c0_24, %c0_25] : memref<1x16x1xf32, #tpu.memory_space<vmem>>, vector<1x16x1xf32>
      tpu.vector_store %arg6[%c0_23, %c0_24, %c0_25], %31 {strides = array<i32>} : memref<1x16x1xf32, #tpu.memory_space<vmem>>, vector<1x16x1xf32>,
    } else {
    }
    return
  }
  func.func @transform_0(%arg0: i32, %arg1: i32) -> (i32, i32, i32) {
    %c0_i32 = arith.constant 0 : i32
    %c0_i32_0 = arith.constant 0 : i32
    return %arg0, %c0_i32, %arg1 : i32, i32, i32
  }
  func.func @transform_1(%arg0: i32, %arg1: i32) -> (i32, i32) {
    %c0_i32 = arith.constant 0 : i32
    %c0_i32_0 = arith.constant 0 : i32
    %c0_i32_1 = arith.constant 0 : i32
    return %c0_i32, %c0_i32_0 : i32, i32
  }
  func.func @transform_2(%arg0: i32, %arg1: i32) -> (i32, i32) {
    %c0_i32 = arith.constant 0 : i32
    %c0_i32_0 = arith.constant 0 : i32
    %c0_i32_1 = arith.constant 0 : i32
    return %c0_i32, %c0_i32_0 : i32, i32
  }
  func.func @transform_3(%arg0: i32, %arg1: i32) -> (i32, i32) {
    %c0_i32 = arith.constant 0 : i32
    %c0_i32_0 = arith.constant 0 : i32
    %c0_i32_1 = arith.constant 0 : i32
    return %c0_i32, %c0_i32_0 : i32, i32
  }
  func.func @transform_4(%arg0: i32, %arg1: i32) -> (i32, i32, i32) {
    %c0_i32 = arith.constant 0 : i32
    %c0_i32_0 = arith.constant 0 : i32
    %c0_i32_1 = arith.constant 0 : i32
    return %arg0, %c0_i32, %c0_i32_0 : i32, i32, i32
  }
  func.func @transform_5(%arg0: i32, %arg1: i32) -> (i32, i32, i32) {
    %c0_i32 = arith.constant 0 : i32
    %c0_i32_0 = arith.constant 0 : i32
    %c0_i32_1 = arith.constant 0 : i32
    return %arg0, %c0_i32, %c0_i32_0 : i32, i32, i32
  }
}

</mosaic_0001>

<llo_original>
// kernel: tpu_custom_call.1
$region0: #{tpu_custom_call.1}
  #allocation0 [shape = 'u32[]', space=smem, size = 0x4, offset = 0x4, fixed_abs, tag = 'smem constant byte address 0x4 - core index']
  #allocation1 [shape = 'u32[72,128]{1,0:T(1,128)}', space=vmem, size = 0x9000, scoped, tag = 'internal scratch']
  #allocation2 [shape = 'f32[32,8]{1,0:T(8,128)}', space=vmem, size = 0x4000, scoped, tag = 'scratch operand']
  %s0 = inlined_call_operand.vmem [shape: f32[2,32,256], index: 0, kind: input, shape index: {}]
  %s1 = inlined_call_operand.vmem [shape: f32[16,32], index: 1, kind: input, shape index: {}]
  %s2 = inlined_call_operand.vmem [shape: f32[16,1], index: 2, kind: input, shape index: {}]
  %s3 = inlined_call_operand.vmem [shape: f32[128,8], index: 3, kind: input, shape index: {}]
  %s4 = inlined_call_operand.vmem [shape: f32[2,16,1], index: 4, kind: output, shape index: {0}]
  %s5 = inlined_call_operand.vmem [shape: f32[2,32,1], index: 5, kind: output, shape index: {1}]
  %6 = xla_tuple %s4, %s5
  %s7 = sld [smem:[#allocation0]]
  $region103: #{tpu_custom_call.1} parent=0
    _
  %s9 = ssub.s32 1, %s7
  %s10 = scalar_select 0, %s9, %s7
  $region1: #{tpu_custom_call.1} parent=0
    #allocation3 [shape = 'u8[32768]{0}', space=vmem, size = 0x8000, scoped, tag = 'input window, operand 0']
    loop: start=0, step=1, limit=6
    $region2: #{tpu_custom_call.1} parent=1 // loop_pre_header
      _
    $region3: #{tpu_custom_call.1} parent=1 // loop_header
      %s12 = sphi 0, %s16
      %p13 = scmp.ge.s32.totalorder %s12, 6
      %s19 = sphi 0, %s31
      %s20 = sphi 0, %s27
      %s21 = sphi 0, %s19
      %s22 = sphi 0, %s20
      %s23 = sphi 0, %s21
      %s24 = sphi 0, %s22
      %s36 = sphi 0, %s38
      %s39 = sphi 0, %s36
      %s40 = sphi 0, %s39
      %s56 = sphi 0, %s40
      %s60 = sphi 0, %s60
      %s62 = sphi 0, %s60
      %s63 = sphi 0, %s62
      %s77 = sphi 0, %s63
      %s81 = sphi 0, %s81
      %s83 = sphi 0, %s81
      %s84 = sphi 0, %s83
      %s98 = sphi 0, %s84
      %s102 = sphi 0, %s102
      %s104 = sphi 0, %s102
      %s105 = sphi 0, %s104
      %s119 = sphi 0, %s105
      %s125 = sphi 0, %s127
      %s128 = sphi 0, %s125
      %s129 = sphi 0, %s128
      %s145 = sphi 0, %s129
      %s151 = sphi 0, %s153
      %s154 = sphi 0, %s151
      %s155 = sphi 0, %s154
      %s171 = sphi 0, %s155
    $region4: #{tpu_custom_call.1} parent=1 // loop_header_branch
      %15 = sbr.rel (%p13) target = $region8
    $region5: #{tpu_custom_call.1} parent=1 // loop_body
      %s17 = ssub.s32 %s12, 1
      %s18 = ssub.s32 %s12, 2
      %s25 = sadd.s32 1, %s20
      %p26 = scmp.ge.s32.totalorder %s25, 2
      %s27 = scalar_select %p26, 0, %s25
      %s28 = sadd.s32 1, %s19
      %s29 = scalar_select %p26, %s28, %s19
      %p30 = scmp.ge.s32.totalorder %s29, 2
      %s31 = scalar_select %p30, 0, %s29
      %s32 = ssub.s32 %s19, %s31
      %s33 = ssub.s32 %s20, %s27
      %s34 = sor.u32 %s32, %s33
      %p35 = scmp.eq.s32.totalorder %s34, 0
      %s37 = sadd.s32 %s36, 1
      %s38 = scalar_select %p35, %s36, %s37
      %p41 = pneg %p35
      %p42 = scmp.eq.s32.totalorder %s12, 3
      %p43 = por %p41, %p42
      %p44 = scmp.ne.s32.totalorder %s36, %s39
      %p45 = scmp.eq.s32.totalorder %s12, 0
      %p46 = por %p44, %p45
      %p47 = scmp.ne.s32.totalorder %s36, %s39
      %p48 = scmp.eq.s32.totalorder %s17, 3
      %p49 = por %p47, %p48
      %p50 = scmp.ne.s32.totalorder %s39, %s40
      %p51 = scmp.eq.s32.totalorder %s17, 0
      %p52 = por %p50, %p51
      %p53 = scmp.ne.s32.totalorder %s39, %s40
      %p54 = scmp.eq.s32.totalorder %s18, 3
      %p55 = por %p53, %p54
      %p57 = scmp.ne.s32.totalorder %s40, %s56
      %p58 = scmp.eq.s32.totalorder %s18, 0
      %p59 = por %p57, %p58
      %s61 = sadd.s32 %s60, 1
      %p64 = scmp.eq.s32.totalorder %s12, 3
      %p65 = scmp.ne.s32.totalorder %s60, %s62
      %p66 = scmp.eq.s32.totalorder %s12, 0
      %p67 = por %p65, %p66
      %p68 = scmp.ne.s32.totalorder %s60, %s62
      %p69 = scmp.eq.s32.totalorder %s17, 3
      %p70 = por %p68, %p69
      %p71 = scmp.ne.s32.totalorder %s62, %s63
      %p72 = scmp.eq.s32.totalorder %s17, 0
      %p73 = por %p71, %p72
      %p74 = scmp.ne.s32.totalorder %s62, %s63
      %p75 = scmp.eq.s32.totalorder %s18, 3
      %p76 = por %p74, %p75
      %p78 = scmp.ne.s32.totalorder %s63, %s77
      %p79 = scmp.eq.s32.totalorder %s18, 0
      %p80 = por %p78, %p79
      %s82 = sadd.s32 %s81, 1
      %p85 = scmp.eq.s32.totalorder %s12, 3
      %p86 = scmp.ne.s32.totalorder %s81, %s83
      %p87 = scmp.eq.s32.totalorder %s12, 0
      %p88 = por %p86, %p87
      %p89 = scmp.ne.s32.totalorder %s81, %s83
      %p90 = scmp.eq.s32.totalorder %s17, 3
      %p91 = por %p89, %p90
      %p92 = scmp.ne.s32.totalorder %s83, %s84
      %p93 = scmp.eq.s32.totalorder %s17, 0
      %p94 = por %p92, %p93
      %p95 = scmp.ne.s32.totalorder %s83, %s84
      %p96 = scmp.eq.s32.totalorder %s18, 3
      %p97 = por %p95, %p96
      %p99 = scmp.ne.s32.totalorder %s84, %s98
      %p100 = scmp.eq.s32.totalorder %s18, 0
      %p101 = por %p99, %p100
      %s103 = sadd.s32 %s102, 1
      %p106 = scmp.eq.s32.totalorder %s12, 3
      %p107 = scmp.ne.s32.totalorder %s102, %s104
      %p108 = scmp.eq.s32.totalorder %s12, 0
      %p109 = por %p107, %p108
      %p110 = scmp.ne.s32.totalorder %s102, %s104
      %p111 = scmp.eq.s32.totalorder %s17, 3
      %p112 = por %p110, %p111
      %p113 = scmp.ne.s32.totalorder %s104, %s105
      %p114 = scmp.eq.s32.totalorder %s17, 0
      %p115 = por %p113, %p114
      %p116 = scmp.ne.s32.totalorder %s104, %s105
      %p117 = scmp.eq.s32.totalorder %s18, 3
      %p118 = por %p116, %p117
      %p120 = scmp.ne.s32.totalorder %s105, %s119
      %p121 = scmp.eq.s32.totalorder %s18, 0
      %p122 = por %p120, %p121
      %s123 = ssub.s32 %s19, %s31
      %p124 = scmp.eq.s32.totalorder %s123, 0
      %s126 = sadd.s32 %s125, 1
      %s127 = scalar_select %p124, %s125, %s126
      %p130 = pneg %p124
      %p131 = scmp.eq.s32.totalorder %s12, 3
      %p132 = por %p130, %p131
      %p133 = scmp.ne.s32.totalorder %s125, %s128
      %p134 = scmp.eq.s32.totalorder %s12, 0
      %p135 = por %p133, %p134
      %p136 = scmp.ne.s32.totalorder %s125, %s128
      %p137 = scmp.eq.s32.totalorder %s17, 3
      %p138 = por %p136, %p137
      %p139 = scmp.ne.s32.totalorder %s128, %s129
      %p140 = scmp.eq.s32.totalorder %s17, 0
      %p141 = por %p139, %p140
      %p142 = scmp.ne.s32.totalorder %s128, %s129
      %p143 = scmp.eq.s32.totalorder %s18, 3
      %p144 = por %p142, %p143
      %p146 = scmp.ne.s32.totalorder %s129, %s145
      %p147 = scmp.eq.s32.totalorder %s18, 0
      %p148 = por %p146, %p147
      %s149 = ssub.s32 %s19, %s31
      %p150 = scmp.eq.s32.totalorder %s149, 0
      %s152 = sadd.s32 %s151, 1
      %s153 = scalar_select %p150, %s151, %s152
      %p156 = pneg %p150
      %p157 = scmp.eq.s32.totalorder %s12, 3
      %p158 = por %p156, %p157
      %p159 = scmp.ne.s32.totalorder %s151, %s154
      %p160 = scmp.eq.s32.totalorder %s12, 0
      %p161 = por %p159, %p160
      %p162 = scmp.ne.s32.totalorder %s151, %s154
      %p163 = scmp.eq.s32.totalorder %s17, 3
      %p164 = por %p162, %p163
      %p165 = scmp.ne.s32.totalorder %s154, %s155
      %p166 = scmp.eq.s32.totalorder %s17, 0
      %p167 = por %p165, %p166
      %p168 = scmp.ne.s32.totalorder %s154, %s155
      %p169 = scmp.eq.s32.totalorder %s18, 3
      %p170 = por %p168, %p169
      %p172 = scmp.ne.s32.totalorder %s155, %s171
      %p173 = scmp.eq.s32.totalorder %s18, 0
      %p174 = por %p172, %p173
      %p175 = scmp.le.s32.totalorder 1, %s12
      %p176 = scmp.lt.s32.totalorder %s12, 5
      %p177 = pnand %p175, %p176
      %p178 = pneg %p177
      // Predicated region
      $region9: #{tpu_custom_call.1} parent=5 // pred_check
        _
      $region10: #{tpu_custom_call.1} parent=5 // pred_check_branch
        %180 = sbr.rel (%p177) target = $region12
      $region11: #{tpu_custom_call.1} parent=5 // pred_region
        %s181 = ssub.s32 %s12, 1
        // Predicated region
        $region13: #{tpu_custom_call.1} parent=11 // pred_check
          %p182 = pneg %p73
        $region14: #{tpu_custom_call.1} parent=11 // pred_check_branch
          %184 = sbr.rel (%p182) target = $region16
        $region15: #{tpu_custom_call.1} parent=11 // pred_region
          _
        $region16: #{tpu_custom_call.1} parent=11 // pred_fallthru
          _
        // Predicated region
        $region17: #{tpu_custom_call.1} parent=11 // pred_check
          %p185 = pneg %p94
        $region18: #{tpu_custom_call.1} parent=11 // pred_check_branch
          %187 = sbr.rel (%p185) target = $region20
        $region19: #{tpu_custom_call.1} parent=11 // pred_region
          _
        $region20: #{tpu_custom_call.1} parent=11 // pred_fallthru
          _
        // Predicated region
        $region21: #{tpu_custom_call.1} parent=11 // pred_check
          %p188 = pneg %p115
        $region22: #{tpu_custom_call.1} parent=11 // pred_check_branch
          %190 = sbr.rel (%p188) target = $region24
        $region23: #{tpu_custom_call.1} parent=11 // pred_region
          _
        $region24: #{tpu_custom_call.1} parent=11 // pred_fallthru
          _
      $region12: #{tpu_custom_call.1} parent=5 // pred_fallthru
        _
      %p191 = scmp.lt.s32.totalorder %s12, 4
      // Predicated region
      $region25: #{tpu_custom_call.1} parent=5 // pred_check
        %p192 = pneg %p191
      $region26: #{tpu_custom_call.1} parent=5 // pred_check_branch
        %194 = sbr.rel (%p192) target = $region28
      $region27: #{tpu_custom_call.1} parent=5 // pred_region
        // Predicated region
        $region29: #{tpu_custom_call.1} parent=27 // pred_check
          %p195 = pneg %p46
        $region30: #{tpu_custom_call.1} parent=27 // pred_check_branch
          %197 = sbr.rel (%p195) target = $region32
        $region31: #{tpu_custom_call.1} parent=27 // pred_region
          %s198 = sand.u32 %s36, 1
          %s199 = sand.u32 %s36, 1
          %s200 = smul.addr %s199, 32
          %s201 = scalar_lea.vmem [#allocation3], %s200
          %s202 = smul.addr %s19, 8
          %s203 = sadd.s32 %s20, %s202
          %s204 = smul.addr %s203, 8
          %s205 = scalar_lea.vmem %s0, %s204
          // Predicated region
          $region33: #{tpu_custom_call.1} parent=31 // pred_check
            _
          $region34: #{tpu_custom_call.1} parent=31 // pred_check_branch
            %207 = sbr.rel (0) target = $region36
          $region35: #{tpu_custom_call.1} parent=31 // pred_region
            // Predicated region
            $region37: #{tpu_custom_call.1} parent=35 // pred_check
              _
            $region38: #{tpu_custom_call.1} parent=35 // pred_check_branch
              %209 = sbr.rel (0) target = $region40
            $region39: #{tpu_custom_call.1} parent=35 // pred_region
              // Predicated region
              $region52: #{tpu_custom_call.1} parent=39 // pred_check
                _
              $region53: #{tpu_custom_call.1} parent=39 // pred_check_branch
                %231 = sbr.rel (0) target = $region55
              $region54: #{tpu_custom_call.1} parent=39 // pred_region
                loop: start=0, step=1, limit=1
                $region56: #{tpu_custom_call.1} parent=54 // loop_pre_header
                  _
                $region57: #{tpu_custom_call.1} parent=54 // loop_header
                  %s233 = sphi 0, %s237
                  %p234 = scmp.ge.s32.totalorder %s233, 1
                  %s238 = sphi %s205, %s205
                  %s239 = sphi %s201, %s201
                $region58: #{tpu_custom_call.1} parent=54 // loop_header_branch
                  %236 = sbr.rel (%p234) target = $region62
                $region59: #{tpu_custom_call.1} parent=54 // loop_body
                  %v240 = vld [vmem:[%s238] sm:$0xff]
                  %241 = vst [vmem:[%s239] sm:$0xff] %v240
                  %v242 = vld [vmem:[%s238 + $0x10] sm:$0xff]
                  %243 = vst [vmem:[%s239 + $0x8] sm:$0xff] %v242
                  %v244 = vld [vmem:[%s238 + $0x20] sm:$0xff]
                  %245 = vst [vmem:[%s239 + $0x10] sm:$0xff] %v244
                  %v246 = vld [vmem:[%s238 + $0x30] sm:$0xff]
                  %247 = vst [vmem:[%s239 + $0x18] sm:$0xff] %v246
                $region60: #{tpu_custom_call.1} parent=54 // loop_footer
                  %s237 = sadd.s32 1, %s233
                $region61: #{tpu_custom_call.1} parent=54 // loop_footer_branch
                  %232 = sbr.rel target = $region57
                $region62: #{tpu_custom_call.1} parent=54 // loop_exit
                  _
              $region55: #{tpu_custom_call.1} parent=39 // pred_fallthru
                _
              // Predicated region
              $region63: #{tpu_custom_call.1} parent=39 // pred_check
                _
              $region64: #{tpu_custom_call.1} parent=39 // pred_check_branch
                %249 = sbr.rel target = $region66
              $region65: #{tpu_custom_call.1} parent=39 // pred_region
                _
              $region66: #{tpu_custom_call.1} parent=39 // pred_fallthru
                _
            $region40: #{tpu_custom_call.1} parent=35 // pred_fallthru
              _
            // Predicated region
            $region41: #{tpu_custom_call.1} parent=35 // pred_check
              _
            $region42: #{tpu_custom_call.1} parent=35 // pred_check_branch
              %211 = sbr.rel target = $region44
            $region43: #{tpu_custom_call.1} parent=35 // pred_region
              %s213 = ssub.s32 256, 1
              loop: start=0, step=1, limit=1
              $region45: #{tpu_custom_call.1} parent=43 // loop_pre_header
                _
              $region46: #{tpu_custom_call.1} parent=43 // loop_header
                %s215 = sphi 0, %s219
                %p216 = scmp.ge.s32.totalorder %s215, 1
                %s220 = sphi %s205, %s205
                %s221 = sphi %s201, %s201
              $region47: #{tpu_custom_call.1} parent=43 // loop_header_branch
                %218 = sbr.rel (%p216) target = $region51
              $region48: #{tpu_custom_call.1} parent=43 // loop_body
                %v222 = vld [vmem:[%s220] sm:%s213]
                %223 = vst [vmem:[%s221] sm:%s213] %v222
                %v224 = vld [vmem:[%s220 + $0x10] sm:%s213]
                %225 = vst [vmem:[%s221 + $0x8] sm:%s213] %v224
                %v226 = vld [vmem:[%s220 + $0x20] sm:%s213]
                %227 = vst [vmem:[%s221 + $0x10] sm:%s213] %v226
                %v228 = vld [vmem:[%s220 + $0x30] sm:%s213]
                %229 = vst [vmem:[%s221 + $0x18] sm:%s213] %v228
              $region49: #{tpu_custom_call.1} parent=43 // loop_footer
                %s219 = sadd.s32 1, %s215
              $region50: #{tpu_custom_call.1} parent=43 // loop_footer_branch
                %214 = sbr.rel target = $region46
              $region51: #{tpu_custom_call.1} parent=43 // loop_exit
                _
            $region44: #{tpu_custom_call.1} parent=35 // pred_fallthru
              _
          $region36: #{tpu_custom_call.1} parent=31 // pred_fallthru
            _
          %250 = vnop
        $region32: #{tpu_custom_call.1} parent=27 // pred_fallthru
          _
      $region28: #{tpu_custom_call.1} parent=5 // pred_fallthru
        _
      %p251 = scmp.le.s32.totalorder 1, %s12
      %p252 = scmp.lt.s32.totalorder %s12, 5
      %p253 = pnand %p251, %p252
      %p254 = pneg %p253
      // Predicated region
      $region67: #{tpu_custom_call.1} parent=5 // pred_check
        _
      $region68: #{tpu_custom_call.1} parent=5 // pred_check_branch
        %256 = sbr.rel (%p253) target = $region70
      $region69: #{tpu_custom_call.1} parent=5 // pred_region
        %s257 = ssub.s32 %s12, 1
        %s258 = sand.u32 %s39, 1
        %s259 = sand.u32 %s39, 1
        %s260 = smul.addr %s259, 32
        %s261 = scalar_lea.vmem [#allocation3], %s260
        // Predicated region
        $region71: #{tpu_custom_call.1} parent=69 // pred_check
          %p262 = pneg %p52
        $region72: #{tpu_custom_call.1} parent=69 // pred_check_branch
          %264 = sbr.rel (%p262) target = $region74
        $region73: #{tpu_custom_call.1} parent=69 // pred_region
          _
        $region74: #{tpu_custom_call.1} parent=69 // pred_fallthru
          _
        %s265 = sand.u32 %s39, 1
        %s266 = sand.u32 %s39, 1
        %s267 = smul.addr %s266, 32
        %s268 = scalar_lea.vmem [#allocation3], %s267
        %p269 = pneg %p52
        %p270 = pneg %p49
        %p271 = pneg %p73
        %p272 = pneg %p70
        %p273 = pneg %p94
        %p274 = pneg %p91
        %p275 = pneg %p115
        %p276 = pneg %p112
        %p277 = pneg %p141
        %p278 = pneg %p138
        %p279 = scmp.lt.s32.totalorder %s21, 1
        %s280 = scalar_select %p279, %s21, 1
        %s281 = smul.addr %s280, 2
        %s282 = smul.addr %s281, 8
        %s283 = scalar_lea.vmem %s4, %s282
        %p284 = pneg %p167
        %p285 = pneg %p164
        %p286 = scmp.lt.s32.totalorder %s21, 1
        %s287 = scalar_select %p286, %s21, 1
        %s288 = smul.addr %s287, 4
        %s289 = smul.addr %s288, 8
        %s290 = scalar_lea.vmem %s5, %s289
        %p291 = scmp.lt.s32.totalorder %s21, 1
        %s292 = scalar_select %p291, %s21, 1
        %s293 = smul.addr %s292, 2
        %s294 = smul.addr %s293, 8
        %s295 = scalar_lea.vmem %s4, %s294
        %p296 = scmp.lt.s32.totalorder %s21, 1
        %s297 = scalar_select %p296, %s21, 1
        %s298 = smul.addr %s297, 4
        %s299 = smul.addr %s298, 8
        %s300 = scalar_lea.vmem %s5, %s299
        %p301 = scmp.eq.s32.totalorder %s22, 0
        // Predicated region
        $region75: #{tpu_custom_call.1} parent=69 // pred_check
          %p302 = pneg %p301
        $region76: #{tpu_custom_call.1} parent=69 // pred_check_branch
          %304 = sbr.rel (%p302) target = $region78
        $region77: #{tpu_custom_call.1} parent=69 // pred_region
          %vm305 = vcmask 64512
          %306 = vst.msk [vmem:[#allocation2] sm:$0xff] %vm305, 0.0
          %307 = vst.msk [vmem:[#allocation2 + $0x8] sm:$0xff] %vm305, 0.0
          %308 = vst.msk [vmem:[#allocation2 + $0x10] sm:$0xff] %vm305, 0.0
          %309 = vst.msk [vmem:[#allocation2 + $0x18] sm:$0xff] %vm305, 0.0
        $region78: #{tpu_custom_call.1} parent=69 // pred_fallthru
          _
        %v310 = vld [vmem:[#allocation2] sm:$0xff]
        %v311 = vld [vmem:[#allocation2 + $0x8] sm:$0xff]
        %v312 = vld [vmem:[#allocation2 + $0x10] sm:$0xff]
        %v313 = vld [vmem:[#allocation2 + $0x18] sm:$0xff]
        %v314 = vld [vmem:[%s261] sm:$0xff]
        %v315 = vld [vmem:[%s261 + $0x8] sm:$0xff]
        %v316 = vld [vmem:[%s261 + $0x10] sm:$0xff]
        %v317 = vld [vmem:[%s261 + $0x18] sm:$0xff]
        %v318 = vld [vmem:[%s3] sm:$0xff]
        %v319 = vld [vmem:[%s3 + $0x8] sm:$0xff]
        %v320 = vld [vmem:[%s3 + $0x10] sm:$0xff]
        %v321 = vld [vmem:[%s3 + $0x18] sm:$0xff]
        %v322 = vld [vmem:[%s3 + $0x20] sm:$0xff]
        %v323 = vld [vmem:[%s3 + $0x28] sm:$0xff]
        %v324 = vld [vmem:[%s3 + $0x30] sm:$0xff]
        %v325 = vld [vmem:[%s3 + $0x38] sm:$0xff]
        %v326 = vld [vmem:[%s3 + $0x40] sm:$0xff]
        %v327 = vld [vmem:[%s3 + $0x48] sm:$0xff]
        %v328 = vld [vmem:[%s3 + $0x50] sm:$0xff]
        %v329 = vld [vmem:[%s3 + $0x58] sm:$0xff]
        %v330 = vld [vmem:[%s3 + $0x60] sm:$0xff]
        %v331 = vld [vmem:[%s3 + $0x68] sm:$0xff]
        %v332 = vld [vmem:[%s3 + $0x70] sm:$0xff]
        %v333 = vld [vmem:[%s3 + $0x78] sm:$0xff]
        %v334 = vand.u32 %v333, 4294901760
        %335 = vmatpush.msra.mxu0 %v334
        %v336 = vand.u32 %v332, 4294901760
        %337 = vmatpush.msra.mxu0 %v336
        %v338 = vand.u32 %v331, 4294901760
        %339 = vmatpush.msra.mxu0 %v338
        %v340 = vand.u32 %v330, 4294901760
        %341 = vmatpush.msra.mxu0 %v340
        %v342 = vand.u32 %v329, 4294901760
        %343 = vmatpush.msra.mxu0 %v342
        %v344 = vand.u32 %v328, 4294901760
        %345 = vmatpush.msra.mxu0 %v344
        %v346 = vand.u32 %v327, 4294901760
        %347 = vmatpush.msra.mxu0 %v346
        %v348 = vand.u32 %v326, 4294901760
        %349 = vmatpush.msra.mxu0 %v348
        %v350 = vand.u32 %v325, 4294901760
        %351 = vmatpush.msra.mxu0 %v350
        %v352 = vand.u32 %v324, 4294901760
        %353 = vmatpush.msra.mxu0 %v352
        %v354 = vand.u32 %v323, 4294901760
        %355 = vmatpush.msra.mxu0 %v354
        %v356 = vand.u32 %v322, 4294901760
        %357 = vmatpush.msra.mxu0 %v356
        %v358 = vand.u32 %v321, 4294901760
        %359 = vmatpush.msra.mxu0 %v358
        %v360 = vand.u32 %v320, 4294901760
        %361 = vmatpush.msra.mxu0 %v360
        %v362 = vand.u32 %v319, 4294901760
        %363 = vmatpush.msra.mxu0 %v362
        %v364 = vand.u32 %v318, 4294901760
        %365 = vmatpush.msra.mxu0 %v364
        %v366 = vand.u32 %v314, 4294901760
        %v367 = vsub.f32 %v314, %v366
        %v368 = vand.u32 %v367, 4294901760
        %v369 = vsub.f32 %v367, %v368
        %v370 = vand.u32 %v369, 4294901760
        %371 = vmatmul.f32.gmra.mxu0 %v370
        %v372 = vpop.f32.mrf.mxu0
        %v373 = vadd.f32 0.0, %v372
        %v374 = vand.u32 %v315, 4294901760
        %v375 = vsub.f32 %v315, %v374
        %v376 = vand.u32 %v375, 4294901760
        %v377 = vsub.f32 %v375, %v376
        %v378 = vand.u32 %v377, 4294901760
        %379 = vmatmul.f32.gmra.mxu0 %v378
        %v380 = vpop.f32.mrf.mxu0
        %v381 = vadd.f32 0.0, %v380
        %v382 = vand.u32 %v316, 4294901760
        %v383 = vsub.f32 %v316, %v382
        %v384 = vand.u32 %v383, 4294901760
        %v385 = vsub.f32 %v383, %v384
        %v386 = vand.u32 %v385, 4294901760
        %387 = vmatmul.f32.gmra.mxu0 %v386
        %v388 = vpop.f32.mrf.mxu0
        %v389 = vadd.f32 0.0, %v388
        %v390 = vand.u32 %v317, 4294901760
        %v391 = vsub.f32 %v317, %v390
        %v392 = vand.u32 %v391, 4294901760
        %v393 = vsub.f32 %v391, %v392
        %v394 = vand.u32 %v393, 4294901760
        %395 = vmatmul.f32.gmra.mxu0 %v394
        %v396 = vpop.f32.mrf.mxu0
        %v397 = vadd.f32 0.0, %v396
        %398 = vdwg.mxu0
        %v399 = vand.u32 %v333, 4294901760
        %v400 = vsub.f32 %v333, %v399
        %v401 = vand.u32 %v400, 4294901760
        %v402 = vsub.f32 %v400, %v401
        %v403 = vand.u32 %v402, 4294901760
        %404 = vmatpush.msra.mxu0 %v403
        %v405 = vand.u32 %v332, 4294901760
        %v406 = vsub.f32 %v332, %v405
        %v407 = vand.u32 %v406, 4294901760
        %v408 = vsub.f32 %v406, %v407
        %v409 = vand.u32 %v408, 4294901760
        %410 = vmatpush.msra.mxu0 %v409
        %v411 = vand.u32 %v331, 4294901760
        %v412 = vsub.f32 %v331, %v411
        %v413 = vand.u32 %v412, 4294901760
        %v414 = vsub.f32 %v412, %v413
        %v415 = vand.u32 %v414, 4294901760
        %416 = vmatpush.msra.mxu0 %v415
        %v417 = vand.u32 %v330, 4294901760
        %v418 = vsub.f32 %v330, %v417
        %v419 = vand.u32 %v418, 4294901760
        %v420 = vsub.f32 %v418, %v419
        %v421 = vand.u32 %v420, 4294901760
        %422 = vmatpush.msra.mxu0 %v421
        %v423 = vand.u32 %v329, 4294901760
        %v424 = vsub.f32 %v329, %v423
        %v425 = vand.u32 %v424, 4294901760
        %v426 = vsub.f32 %v424, %v425
        %v427 = vand.u32 %v426, 4294901760
        %428 = vmatpush.msra.mxu0 %v427
        %v429 = vand.u32 %v328, 4294901760
        %v430 = vsub.f32 %v328, %v429
        %v431 = vand.u32 %v430, 4294901760
        %v432 = vsub.f32 %v430, %v431
        %v433 = vand.u32 %v432, 4294901760
        %434 = vmatpush.msra.mxu0 %v433
        %v435 = vand.u32 %v327, 4294901760
        %v436 = vsub.f32 %v327, %v435
        %v437 = vand.u32 %v436, 4294901760
        %v438 = vsub.f32 %v436, %v437
        %v439 = vand.u32 %v438, 4294901760
        %440 = vmatpush.msra.mxu0 %v439
        %v441 = vand.u32 %v326, 4294901760
        %v442 = vsub.f32 %v326, %v441
        %v443 = vand.u32 %v442, 4294901760
        %v444 = vsub.f32 %v442, %v443
        %v445 = vand.u32 %v444, 4294901760
        %446 = vmatpush.msra.mxu0 %v445
        %v447 = vand.u32 %v325, 4294901760
        %v448 = vsub.f32 %v325, %v447
        %v449 = vand.u32 %v448, 4294901760
        %v450 = vsub.f32 %v448, %v449
        %v451 = vand.u32 %v450, 4294901760
        %452 = vmatpush.msra.mxu0 %v451
        %v453 = vand.u32 %v324, 4294901760
        %v454 = vsub.f32 %v324, %v453
        %v455 = vand.u32 %v454, 4294901760
        %v456 = vsub.f32 %v454, %v455
        %v457 = vand.u32 %v456, 4294901760
        %458 = vmatpush.msra.mxu0 %v457
        %v459 = vand.u32 %v323, 4294901760
        %v460 = vsub.f32 %v323, %v459
        %v461 = vand.u32 %v460, 4294901760
        %v462 = vsub.f32 %v460, %v461
        %v463 = vand.u32 %v462, 4294901760
        %464 = vmatpush.msra.mxu0 %v463
        %v465 = vand.u32 %v322, 4294901760
        %v466 = vsub.f32 %v322, %v465
        %v467 = vand.u32 %v466, 4294901760
        %v468 = vsub.f32 %v466, %v467
        %v469 = vand.u32 %v468, 4294901760
        %470 = vmatpush.msra.mxu0 %v469
        %v471 = vand.u32 %v321, 4294901760
        %v472 = vsub.f32 %v321, %v471
        %v473 = vand.u32 %v472, 4294901760
        %v474 = vsub.f32 %v472, %v473
        %v475 = vand.u32 %v474, 4294901760
        %476 = vmatpush.msra.mxu0 %v475
        %v477 = vand.u32 %v320, 4294901760
        %v478 = vsub.f32 %v320, %v477
        %v479 = vand.u32 %v478, 4294901760
        %v480 = vsub.f32 %v478, %v479
        %v481 = vand.u32 %v480, 4294901760
        %482 = vmatpush.msra.mxu0 %v481
        %v483 = vand.u32 %v319, 4294901760
        %v484 = vsub.f32 %v319, %v483
        %v485 = vand.u32 %v484, 4294901760
        %v486 = vsub.f32 %v484, %v485
        %v487 = vand.u32 %v486, 4294901760
        %488 = vmatpush.msra.mxu0 %v487
        %v489 = vand.u32 %v318, 4294901760
        %v490 = vsub.f32 %v318, %v489
        %v491 = vand.u32 %v490, 4294901760
        %v492 = vsub.f32 %v490, %v491
        %v493 = vand.u32 %v492, 4294901760
        %494 = vmatpush.msra.mxu0 %v493
        %v495 = vand.u32 %v314, 4294901760
        %496 = vmatmul.f32.gmra.mxu0 %v495
        %v497 = vpop.f32.mrf.mxu0
        %v498 = vadd.f32 %v373, %v497
        %v499 = vand.u32 %v315, 4294901760
        %500 = vmatmul.f32.gmra.mxu0 %v499
        %v501 = vpop.f32.mrf.mxu0
        %v502 = vadd.f32 %v381, %v501
        %v503 = vand.u32 %v316, 4294901760
        %504 = vmatmul.f32.gmra.mxu0 %v503
        %v505 = vpop.f32.mrf.mxu0
        %v506 = vadd.f32 %v389, %v505
        %v507 = vand.u32 %v317, 4294901760
        %508 = vmatmul.f32.gmra.mxu0 %v507
        %v509 = vpop.f32.mrf.mxu0
        %v510 = vadd.f32 %v397, %v509
        %511 = vdwg.mxu0
        %v512 = vand.u32 %v333, 4294901760
        %v513 = vsub.f32 %v333, %v512
        %514 = vmatpush.msra.mxu0 %v513
        %v515 = vand.u32 %v332, 4294901760
        %v516 = vsub.f32 %v332, %v515
        %517 = vmatpush.msra.mxu0 %v516
        %v518 = vand.u32 %v331, 4294901760
        %v519 = vsub.f32 %v331, %v518
        %520 = vmatpush.msra.mxu0 %v519
        %v521 = vand.u32 %v330, 4294901760
        %v522 = vsub.f32 %v330, %v521
        %523 = vmatpush.msra.mxu0 %v522
        %v524 = vand.u32 %v329, 4294901760
        %v525 = vsub.f32 %v329, %v524
        %526 = vmatpush.msra.mxu0 %v525
        %v527 = vand.u32 %v328, 4294901760
        %v528 = vsub.f32 %v328, %v527
        %529 = vmatpush.msra.mxu0 %v528
        %v530 = vand.u32 %v327, 4294901760
        %v531 = vsub.f32 %v327, %v530
        %532 = vmatpush.msra.mxu0 %v531
        %v533 = vand.u32 %v326, 4294901760
        %v534 = vsub.f32 %v326, %v533
        %535 = vmatpush.msra.mxu0 %v534
        %v536 = vand.u32 %v325, 4294901760
        %v537 = vsub.f32 %v325, %v536
        %538 = vmatpush.msra.mxu0 %v537
        %v539 = vand.u32 %v324, 4294901760
        %v540 = vsub.f32 %v324, %v539
        %541 = vmatpush.msra.mxu0 %v540
        %v542 = vand.u32 %v323, 4294901760
        %v543 = vsub.f32 %v323, %v542
        %544 = vmatpush.msra.mxu0 %v543
        %v545 = vand.u32 %v322, 4294901760
        %v546 = vsub.f32 %v322, %v545
        %547 = vmatpush.msra.mxu0 %v546
        %v548 = vand.u32 %v321, 4294901760
        %v549 = vsub.f32 %v321, %v548
        %550 = vmatpush.msra.mxu0 %v549
        %v551 = vand.u32 %v320, 4294901760
        %v552 = vsub.f32 %v320, %v551
        %553 = vmatpush.msra.mxu0 %v552
        %v554 = vand.u32 %v319, 4294901760
        %v555 = vsub.f32 %v319, %v554
        %556 = vmatpush.msra.mxu0 %v555
        %v557 = vand.u32 %v318, 4294901760
        %v558 = vsub.f32 %v318, %v557
        %559 = vmatpush.msra.mxu0 %v558
        %v560 = vand.u32 %v314, 4294901760
        %v561 = vsub.f32 %v314, %v560
        %562 = vmatmul.f32.gmra.mxu0 %v561
        %v563 = vpop.f32.mrf.mxu0
        %v564 = vadd.f32 %v498, %v563
        %v565 = vand.u32 %v315, 4294901760
        %v566 = vsub.f32 %v315, %v565
        %567 = vmatmul.f32.gmra.mxu0 %v566
        %v568 = vpop.f32.mrf.mxu0
        %v569 = vadd.f32 %v502, %v568
        %v570 = vand.u32 %v316, 4294901760
        %v571 = vsub.f32 %v316, %v570
        %572 = vmatmul.f32.gmra.mxu0 %v571
        %v573 = vpop.f32.mrf.mxu0
        %v574 = vadd.f32 %v506, %v573
        %v575 = vand.u32 %v317, 4294901760
        %v576 = vsub.f32 %v317, %v575
        %577 = vmatmul.f32.gmra.mxu0 %v576
        %v578 = vpop.f32.mrf.mxu0
        %v579 = vadd.f32 %v510, %v578
        %580 = vdwg.mxu0
        %v581 = vand.u32 %v333, 4294901760
        %582 = vmatpush.msra.mxu0 %v581
        %v583 = vand.u32 %v332, 4294901760
        %584 = vmatpush.msra.mxu0 %v583
        %v585 = vand.u32 %v331, 4294901760
        %586 = vmatpush.msra.mxu0 %v585
        %v587 = vand.u32 %v330, 4294901760
        %588 = vmatpush.msra.mxu0 %v587
        %v589 = vand.u32 %v329, 4294901760
        %590 = vmatpush.msra.mxu0 %v589
        %v591 = vand.u32 %v328, 4294901760
        %592 = vmatpush.msra.mxu0 %v591
        %v593 = vand.u32 %v327, 4294901760
        %594 = vmatpush.msra.mxu0 %v593
        %v595 = vand.u32 %v326, 4294901760
        %596 = vmatpush.msra.mxu0 %v595
        %v597 = vand.u32 %v325, 4294901760
        %598 = vmatpush.msra.mxu0 %v597
        %v599 = vand.u32 %v324, 4294901760
        %600 = vmatpush.msra.mxu0 %v599
        %v601 = vand.u32 %v323, 4294901760
        %602 = vmatpush.msra.mxu0 %v601
        %v603 = vand.u32 %v322, 4294901760
        %604 = vmatpush.msra.mxu0 %v603
        %v605 = vand.u32 %v321, 4294901760
        %606 = vmatpush.msra.mxu0 %v605
        %v607 = vand.u32 %v320, 4294901760
        %608 = vmatpush.msra.mxu0 %v607
        %v609 = vand.u32 %v319, 4294901760
        %610 = vmatpush.msra.mxu0 %v609
        %v611 = vand.u32 %v318, 4294901760
        %612 = vmatpush.msra.mxu0 %v611
        %v613 = vand.u32 %v314, 4294901760
        %v614 = vsub.f32 %v314, %v613
        %v615 = vand.u32 %v614, 4294901760
        %616 = vmatmul.f32.gmra.mxu0 %v615
        %v617 = vpop.f32.mrf.mxu0
        %v618 = vadd.f32 %v564, %v617
        %v619 = vand.u32 %v315, 4294901760
        %v620 = vsub.f32 %v315, %v619
        %v621 = vand.u32 %v620, 4294901760
        %622 = vmatmul.f32.gmra.mxu0 %v621
        %v623 = vpop.f32.mrf.mxu0
        %v624 = vadd.f32 %v569, %v623
        %v625 = vand.u32 %v316, 4294901760
        %v626 = vsub.f32 %v316, %v625
        %v627 = vand.u32 %v626, 4294901760
        %628 = vmatmul.f32.gmra.mxu0 %v627
        %v629 = vpop.f32.mrf.mxu0
        %v630 = vadd.f32 %v574, %v629
        %v631 = vand.u32 %v317, 4294901760
        %v632 = vsub.f32 %v317, %v631
        %v633 = vand.u32 %v632, 4294901760
        %634 = vmatmul.f32.gmra.mxu0 %v633
        %v635 = vpop.f32.mrf.mxu0
        %v636 = vadd.f32 %v579, %v635
        %637 = vdwg.mxu0
        %v638 = vand.u32 %v333, 4294901760
        %v639 = vsub.f32 %v333, %v638
        %v640 = vand.u32 %v639, 4294901760
        %641 = vmatpush.msra.mxu0 %v640
        %v642 = vand.u32 %v332, 4294901760
        %v643 = vsub.f32 %v332, %v642
        %v644 = vand.u32 %v643, 4294901760
        %645 = vmatpush.msra.mxu0 %v644
        %v646 = vand.u32 %v331, 4294901760
        %v647 = vsub.f32 %v331, %v646
        %v648 = vand.u32 %v647, 4294901760
        %649 = vmatpush.msra.mxu0 %v648
        %v650 = vand.u32 %v330, 4294901760
        %v651 = vsub.f32 %v330, %v650
        %v652 = vand.u32 %v651, 4294901760
        %653 = vmatpush.msra.mxu0 %v652
        %v654 = vand.u32 %v329, 4294901760
        %v655 = vsub.f32 %v329, %v654
        %v656 = vand.u32 %v655, 4294901760
        %657 = vmatpush.msra.mxu0 %v656
        %v658 = vand.u32 %v328, 4294901760
        %v659 = vsub.f32 %v328, %v658
        %v660 = vand.u32 %v659, 4294901760
        %661 = vmatpush.msra.mxu0 %v660
        %v662 = vand.u32 %v327, 4294901760
        %v663 = vsub.f32 %v327, %v662
        %v664 = vand.u32 %v663, 4294901760
        %665 = vmatpush.msra.mxu0 %v664
        %v666 = vand.u32 %v326, 4294901760
        %v667 = vsub.f32 %v326, %v666
        %v668 = vand.u32 %v667, 4294901760
        %669 = vmatpush.msra.mxu0 %v668
        %v670 = vand.u32 %v325, 4294901760
        %v671 = vsub.f32 %v325, %v670
        %v672 = vand.u32 %v671, 4294901760
        %673 = vmatpush.msra.mxu0 %v672
        %v674 = vand.u32 %v324, 4294901760
        %v675 = vsub.f32 %v324, %v674
        %v676 = vand.u32 %v675, 4294901760
        %677 = vmatpush.msra.mxu0 %v676
        %v678 = vand.u32 %v323, 4294901760
        %v679 = vsub.f32 %v323, %v678
        %v680 = vand.u32 %v679, 4294901760
        %681 = vmatpush.msra.mxu0 %v680
        %v682 = vand.u32 %v322, 4294901760
        %v683 = vsub.f32 %v322, %v682
        %v684 = vand.u32 %v683, 4294901760
        %685 = vmatpush.msra.mxu0 %v684
        %v686 = vand.u32 %v321, 4294901760
        %v687 = vsub.f32 %v321, %v686
        %v688 = vand.u32 %v687, 4294901760
        %689 = vmatpush.msra.mxu0 %v688
        %v690 = vand.u32 %v320, 4294901760
        %v691 = vsub.f32 %v320, %v690
        %v692 = vand.u32 %v691, 4294901760
        %693 = vmatpush.msra.mxu0 %v692
        %v694 = vand.u32 %v319, 4294901760
        %v695 = vsub.f32 %v319, %v694
        %v696 = vand.u32 %v695, 4294901760
        %697 = vmatpush.msra.mxu0 %v696
        %v698 = vand.u32 %v318, 4294901760
        %v699 = vsub.f32 %v318, %v698
        %v700 = vand.u32 %v699, 4294901760
        %701 = vmatpush.msra.mxu0 %v700
        %v702 = vand.u32 %v314, 4294901760
        %703 = vmatmul.f32.gmra.mxu0 %v702
        %v704 = vpop.f32.mrf.mxu0
        %v705 = vadd.f32 %v618, %v704
        %v706 = vand.u32 %v315, 4294901760
        %707 = vmatmul.f32.gmra.mxu0 %v706
        %v708 = vpop.f32.mrf.mxu0
        %v709 = vadd.f32 %v624, %v708
        %v710 = vand.u32 %v316, 4294901760
        %711 = vmatmul.f32.gmra.mxu0 %v710
        %v712 = vpop.f32.mrf.mxu0
        %v713 = vadd.f32 %v630, %v712
        %v714 = vand.u32 %v317, 4294901760
        %715 = vmatmul.f32.gmra.mxu0 %v714
        %v716 = vpop.f32.mrf.mxu0
        %v717 = vadd.f32 %v636, %v716
        %718 = vdwg.mxu0
        %v719 = vand.u32 %v333, 4294901760
        %720 = vmatpush.msra.mxu0 %v719
        %v721 = vand.u32 %v332, 4294901760
        %722 = vmatpush.msra.mxu0 %v721
        %v723 = vand.u32 %v331, 4294901760
        %724 = vmatpush.msra.mxu0 %v723
        %v725 = vand.u32 %v330, 4294901760
        %726 = vmatpush.msra.mxu0 %v725
        %v727 = vand.u32 %v329, 4294901760
        %728 = vmatpush.msra.mxu0 %v727
        %v729 = vand.u32 %v328, 4294901760
        %730 = vmatpush.msra.mxu0 %v729
        %v731 = vand.u32 %v327, 4294901760
        %732 = vmatpush.msra.mxu0 %v731
        %v733 = vand.u32 %v326, 4294901760
        %734 = vmatpush.msra.mxu0 %v733
        %v735 = vand.u32 %v325, 4294901760
        %736 = vmatpush.msra.mxu0 %v735
        %v737 = vand.u32 %v324, 4294901760
        %738 = vmatpush.msra.mxu0 %v737
        %v739 = vand.u32 %v323, 4294901760
        %740 = vmatpush.msra.mxu0 %v739
        %v741 = vand.u32 %v322, 4294901760
        %742 = vmatpush.msra.mxu0 %v741
        %v743 = vand.u32 %v321, 4294901760
        %744 = vmatpush.msra.mxu0 %v743
        %v745 = vand.u32 %v320, 4294901760
        %746 = vmatpush.msra.mxu0 %v745
        %v747 = vand.u32 %v319, 4294901760
        %748 = vmatpush.msra.mxu0 %v747
        %v749 = vand.u32 %v318, 4294901760
        %750 = vmatpush.msra.mxu0 %v749
        %v751 = vand.u32 %v314, 4294901760
        %752 = vmatmul.f32.gmra.mxu0 %v751
        %v753 = vpop.f32.mrf.mxu0
        %v754 = vadd.f32 %v705, %v753
        %v755 = vand.u32 %v315, 4294901760
        %756 = vmatmul.f32.gmra.mxu0 %v755
        %v757 = vpop.f32.mrf.mxu0
        %v758 = vadd.f32 %v709, %v757
        %v759 = vand.u32 %v316, 4294901760
        %760 = vmatmul.f32.gmra.mxu0 %v759
        %v761 = vpop.f32.mrf.mxu0
        %v762 = vadd.f32 %v713, %v761
        %v763 = vand.u32 %v317, 4294901760
        %764 = vmatmul.f32.gmra.mxu0 %v763
        %v765 = vpop.f32.mrf.mxu0
        %v766 = vadd.f32 %v717, %v765
        %767 = vdwg.mxu0
        %v768 = vadd.f32 %v310, %v754
        %v769 = vadd.f32 %v311, %v758
        %v770 = vadd.f32 %v312, %v762
        %v771 = vadd.f32 %v313, %v766
        %vm772 = vcmask 64512
        %773 = vst.msk [vmem:[#allocation2] sm:$0xff] %vm772, %v768
        %774 = vst.msk [vmem:[#allocation2 + $0x8] sm:$0xff] %vm772, %v769
        %775 = vst.msk [vmem:[#allocation2 + $0x10] sm:$0xff] %vm772, %v770
        %776 = vst.msk [vmem:[#allocation2 + $0x18] sm:$0xff] %vm772, %v771
        %p777 = scmp.eq.s32.totalorder %s22, 1
        // Predicated region
        $region79: #{tpu_custom_call.1} parent=69 // pred_check
          %p778 = pneg %p777
        $region80: #{tpu_custom_call.1} parent=69 // pred_check_branch
          %780 = sbr.rel (%p778) target = $region82
        $region81: #{tpu_custom_call.1} parent=69 // pred_region
          %v781 = vld [vmem:[#allocation2] sm:$0xff]
          %v782 = vld [vmem:[#allocation2 + $0x8] sm:$0xff]
          %v783 = vld [vmem:[#allocation2 + $0x10] sm:$0xff]
          %v784 = vld [vmem:[#allocation2 + $0x18] sm:$0xff]
          %v785 = vmul.f32 %v781, 0.00390625
          %v786 = vmul.f32 %v782, 0.00390625
          %v787 = vmul.f32 %v783, 0.00390625
          %v788 = vmul.f32 %v784, 0.00390625
          %vm789 = vcmask 7168
          %790 = vst.msk [vmem:[%s300] sm:$0xff] %vm789, %v785
          %791 = vst.msk [vmem:[%s300 + $0x8] sm:$0xff] %vm789, %v786
          %792 = vst.msk [vmem:[%s300 + $0x10] sm:$0xff] %vm789, %v787
          %793 = vst.msk [vmem:[%s300 + $0x18] sm:$0xff] %vm789, %v788
          %v794 = vld [vmem:[%s1] sm:$0xff]
          %v795 = vld [vmem:[%s1 + $0x8] sm:$0xff]
          %v796 = vld [vmem:[%s2] sm:$0xff]
          %v797 = vld [vmem:[%s2 + $0x8] sm:$0xff]
          %vm798 = vcmask 261120
          %v800 = vsel %vm798, %v794, 0
          %v803 = vsel %vm798, %v795, 0
          %805 = vmatpush.msra.mxu0 0.0
          %806 = vmatpush.msra.mxu0 0.0
          %807 = vmatpush.msra.mxu0 0.0
          %808 = vmatpush.msra.mxu0 0.0
          %809 = vmatpush.msra.mxu0 0.0
          %810 = vmatpush.msra.mxu0 0.0
          %811 = vmatpush.msra.mxu0 0.0
          %812 = vmatpush.msra.mxu0 0.0
          %813 = vmatpush.msra.mxu0 0.0
          %814 = vmatpush.msra.mxu0 0.0
          %815 = vmatpush.msra.mxu0 0.0
          %816 = vmatpush.msra.mxu0 0.0
          %v817 = vand.u32 %v788, 4294901760
          %818 = vmatpush.msra.mxu0 %v817
          %v819 = vand.u32 %v787, 4294901760
          %820 = vmatpush.msra.mxu0 %v819
          %v821 = vand.u32 %v786, 4294901760
          %822 = vmatpush.msra.mxu0 %v821
          %v823 = vand.u32 %v785, 4294901760
          %824 = vmatpush.msra.mxu0 %v823
          %v825 = vand.u32 %v800, 4294901760
          %v826 = vsub.f32 %v800, %v825
          %v827 = vand.u32 %v826, 4294901760
          %v828 = vsub.f32 %v826, %v827
          %v829 = vand.u32 %v828, 4294901760
          %830 = vmatmul.f32.gmra.mxu0 %v829
          %v831 = vpop.f32.mrf.mxu0
          %v832 = vadd.f32 %v796, %v831
          %v833 = vand.u32 %v803, 4294901760
          %v834 = vsub.f32 %v803, %v833
          %v835 = vand.u32 %v834, 4294901760
          %v836 = vsub.f32 %v834, %v835
          %v837 = vand.u32 %v836, 4294901760
          %838 = vmatmul.f32.gmra.mxu0 %v837
          %v839 = vpop.f32.mrf.mxu0
          %v840 = vadd.f32 %v797, %v839
          %841 = vdwg.mxu0
          %842 = vmatpush.msra.mxu0 0.0
          %843 = vmatpush.msra.mxu0 0.0
          %844 = vmatpush.msra.mxu0 0.0
          %845 = vmatpush.msra.mxu0 0.0
          %846 = vmatpush.msra.mxu0 0.0
          %847 = vmatpush.msra.mxu0 0.0
          %848 = vmatpush.msra.mxu0 0.0
          %849 = vmatpush.msra.mxu0 0.0
          %850 = vmatpush.msra.mxu0 0.0
          %851 = vmatpush.msra.mxu0 0.0
          %852 = vmatpush.msra.mxu0 0.0
          %853 = vmatpush.msra.mxu0 0.0
          %v854 = vand.u32 %v788, 4294901760
          %v855 = vsub.f32 %v788, %v854
          %v856 = vand.u32 %v855, 4294901760
          %v857 = vsub.f32 %v855, %v856
          %v858 = vand.u32 %v857, 4294901760
          %859 = vmatpush.msra.mxu0 %v858
          %v860 = vand.u32 %v787, 4294901760
          %v861 = vsub.f32 %v787, %v860
          %v862 = vand.u32 %v861, 4294901760
          %v863 = vsub.f32 %v861, %v862
          %v864 = vand.u32 %v863, 4294901760
          %865 = vmatpush.msra.mxu0 %v864
          %v866 = vand.u32 %v786, 4294901760
          %v867 = vsub.f32 %v786, %v866
          %v868 = vand.u32 %v867, 4294901760
          %v869 = vsub.f32 %v867, %v868
          %v870 = vand.u32 %v869, 4294901760
          %871 = vmatpush.msra.mxu0 %v870
          %v872 = vand.u32 %v785, 4294901760
          %v873 = vsub.f32 %v785, %v872
          %v874 = vand.u32 %v873, 4294901760
          %v875 = vsub.f32 %v873, %v874
          %v876 = vand.u32 %v875, 4294901760
          %877 = vmatpush.msra.mxu0 %v876
          %v878 = vand.u32 %v800, 4294901760
          %879 = vmatmul.f32.gmra.mxu0 %v878
          %v880 = vpop.f32.mrf.mxu0
          %v881 = vadd.f32 %v832, %v880
          %v882 = vand.u32 %v803, 4294901760
          %883 = vmatmul.f32.gmra.mxu0 %v882
          %v884 = vpop.f32.mrf.mxu0
          %v885 = vadd.f32 %v840, %v884
          %886 = vdwg.mxu0
          %887 = vmatpush.msra.mxu0 0.0
          %888 = vmatpush.msra.mxu0 0.0
          %889 = vmatpush.msra.mxu0 0.0
          %890 = vmatpush.msra.mxu0 0.0
          %891 = vmatpush.msra.mxu0 0.0
          %892 = vmatpush.msra.mxu0 0.0
          %893 = vmatpush.msra.mxu0 0.0
          %894 = vmatpush.msra.mxu0 0.0
          %895 = vmatpush.msra.mxu0 0.0
          %896 = vmatpush.msra.mxu0 0.0
          %897 = vmatpush.msra.mxu0 0.0
          %898 = vmatpush.msra.mxu0 0.0
          %v899 = vand.u32 %v788, 4294901760
          %v900 = vsub.f32 %v788, %v899
          %901 = vmatpush.msra.mxu0 %v900
          %v902 = vand.u32 %v787, 4294901760
          %v903 = vsub.f32 %v787, %v902
          %904 = vmatpush.msra.mxu0 %v903
          %v905 = vand.u32 %v786, 4294901760
          %v906 = vsub.f32 %v786, %v905
          %907 = vmatpush.msra.mxu0 %v906
          %v908 = vand.u32 %v785, 4294901760
          %v909 = vsub.f32 %v785, %v908
          %910 = vmatpush.msra.mxu0 %v909
          %v911 = vand.u32 %v800, 4294901760
          %v912 = vsub.f32 %v800, %v911
          %913 = vmatmul.f32.gmra.mxu0 %v912
          %v914 = vpop.f32.mrf.mxu0
          %v915 = vadd.f32 %v881, %v914
          %v916 = vand.u32 %v803, 4294901760
          %v917 = vsub.f32 %v803, %v916
          %918 = vmatmul.f32.gmra.mxu0 %v917
          %v919 = vpop.f32.mrf.mxu0
          %v920 = vadd.f32 %v885, %v919
          %921 = vdwg.mxu0
          %922 = vmatpush.msra.mxu0 0.0
          %923 = vmatpush.msra.mxu0 0.0
          %924 = vmatpush.msra.mxu0 0.0
          %925 = vmatpush.msra.mxu0 0.0
          %926 = vmatpush.msra.mxu0 0.0
          %927 = vmatpush.msra.mxu0 0.0
          %928 = vmatpush.msra.mxu0 0.0
          %929 = vmatpush.msra.mxu0 0.0
          %930 = vmatpush.msra.mxu0 0.0
          %931 = vmatpush.msra.mxu0 0.0
          %932 = vmatpush.msra.mxu0 0.0
          %933 = vmatpush.msra.mxu0 0.0
          %v934 = vand.u32 %v788, 4294901760
          %935 = vmatpush.msra.mxu0 %v934
          %v936 = vand.u32 %v787, 4294901760
          %937 = vmatpush.msra.mxu0 %v936
          %v938 = vand.u32 %v786, 4294901760
          %939 = vmatpush.msra.mxu0 %v938
          %v940 = vand.u32 %v785, 4294901760
          %941 = vmatpush.msra.mxu0 %v940
          %v942 = vand.u32 %v800, 4294901760
          %v943 = vsub.f32 %v800, %v942
          %v944 = vand.u32 %v943, 4294901760
          %945 = vmatmul.f32.gmra.mxu0 %v944
          %v946 = vpop.f32.mrf.mxu0
          %v947 = vadd.f32 %v915, %v946
          %v948 = vand.u32 %v803, 4294901760
          %v949 = vsub.f32 %v803, %v948
          %v950 = vand.u32 %v949, 4294901760
          %951 = vmatmul.f32.gmra.mxu0 %v950
          %v952 = vpop.f32.mrf.mxu0
          %v953 = vadd.f32 %v920, %v952
          %954 = vdwg.mxu0
          %955 = vmatpush.msra.mxu0 0.0
          %956 = vmatpush.msra.mxu0 0.0
          %957 = vmatpush.msra.mxu0 0.0
          %958 = vmatpush.msra.mxu0 0.0
          %959 = vmatpush.msra.mxu0 0.0
          %960 = vmatpush.msra.mxu0 0.0
          %961 = vmatpush.msra.mxu0 0.0
          %962 = vmatpush.msra.mxu0 0.0
          %963 = vmatpush.msra.mxu0 0.0
          %964 = vmatpush.msra.mxu0 0.0
          %965 = vmatpush.msra.mxu0 0.0
          %966 = vmatpush.msra.mxu0 0.0
          %v967 = vand.u32 %v788, 4294901760
          %v968 = vsub.f32 %v788, %v967
          %v969 = vand.u32 %v968, 4294901760
          %970 = vmatpush.msra.mxu0 %v969
          %v971 = vand.u32 %v787, 4294901760
          %v972 = vsub.f32 %v787, %v971
          %v973 = vand.u32 %v972, 4294901760
          %974 = vmatpush.msra.mxu0 %v973
          %v975 = vand.u32 %v786, 4294901760
          %v976 = vsub.f32 %v786, %v975
          %v977 = vand.u32 %v976, 4294901760
          %978 = vmatpush.msra.mxu0 %v977
          %v979 = vand.u32 %v785, 4294901760
          %v980 = vsub.f32 %v785, %v979
          %v981 = vand.u32 %v980, 4294901760
          %982 = vmatpush.msra.mxu0 %v981
          %v983 = vand.u32 %v800, 4294901760
          %984 = vmatmul.f32.gmra.mxu0 %v983
          %v985 = vpop.f32.mrf.mxu0
          %v986 = vadd.f32 %v947, %v985
          %v987 = vand.u32 %v803, 4294901760
          %988 = vmatmul.f32.gmra.mxu0 %v987
          %v989 = vpop.f32.mrf.mxu0
          %v990 = vadd.f32 %v953, %v989
          %991 = vdwg.mxu0
          %992 = vmatpush.msra.mxu0 0.0
          %993 = vmatpush.msra.mxu0 0.0
          %994 = vmatpush.msra.mxu0 0.0
          %995 = vmatpush.msra.mxu0 0.0
          %996 = vmatpush.msra.mxu0 0.0
          %997 = vmatpush.msra.mxu0 0.0
          %998 = vmatpush.msra.mxu0 0.0
          %999 = vmatpush.msra.mxu0 0.0
          %1000 = vmatpush.msra.mxu0 0.0
          %1001 = vmatpush.msra.mxu0 0.0
          %1002 = vmatpush.msra.mxu0 0.0
          %1003 = vmatpush.msra.mxu0 0.0
          %v1004 = vand.u32 %v788, 4294901760
          %1005 = vmatpush.msra.mxu0 %v1004
          %v1006 = vand.u32 %v787, 4294901760
          %1007 = vmatpush.msra.mxu0 %v1006
          %v1008 = vand.u32 %v786, 4294901760
          %1009 = vmatpush.msra.mxu0 %v1008
          %v1010 = vand.u32 %v785, 4294901760
          %1011 = vmatpush.msra.mxu0 %v1010
          %v1012 = vand.u32 %v800, 4294901760
          %1013 = vmatmul.f32.gmra.mxu0 %v1012
          %v1014 = vpop.f32.mrf.mxu0
          %v1015 = vadd.f32 %v986, %v1014
          %v1016 = vand.u32 %v803, 4294901760
          %1017 = vmatmul.f32.gmra.mxu0 %v1016
          %v1018 = vpop.f32.mrf.mxu0
          %v1019 = vadd.f32 %v990, %v1018
          %1020 = vdwg.mxu0
          %v1021 = vsel %vm789, %v1015, -inf
          %v1022 = vsel %vm789, %v1019, -inf
          %v1023 = vmax.f32 %v1021, %v1022
          %v1024 = vrot.slane %v1023, 4
          %v1025 = vmax.f32 %v1023, %v1024
          %v1026 = vrot.slane %v1025, 2
          %v1027 = vmax.f32 %v1025, %v1026
          %v1028 = vrot.slane %v1027, 1
          %v1029 = vmax.f32 %v1027, %v1028
          %v1030 = vsub.f32 %v1015, %v1029
          %v1031 = vsub.f32 %v1019, %v1029
          %v1032 = vmul.f32 %v1030, 1.442695
          %v1033 = vpow.pop %v1032
          %v1034 = vmul.f32 %v1031, 1.442695
          %v1035 = vpow.pop %v1034
          %v1036 = vsel %vm789, %v1033, 0.0
          %v1037 = vsel %vm789, %v1035, 0.0
          %v1038 = vadd.f32 %v1036, %v1037
          %v1039 = vrot.slane %v1038, 4
          %v1040 = vadd.f32 %v1038, %v1039
          %v1041 = vrot.slane %v1040, 2
          %v1042 = vadd.f32 %v1040, %v1041
          %v1043 = vrot.slane %v1042, 1
          %v1044 = vadd.f32 %v1042, %v1043
          %v1045 = vrcp.pop %v1044
          %v1046 = vmul.f32 %v1044, %v1045
          %v1047 = vsub.f32 1.0, %v1046
          %v1048 = vmul.f32 %v1045, %v1047
          %v1049 = vadd.f32 %v1045, %v1048
          %vm1050 = vweird.f32 %v1044
          %vm1051 = vweird.f32 %v1045
          %vm1052 = vmor %vm1050, %vm1051
          %v1053 = vsel %vm1052, %v1045, %v1049
          %v1054 = vand.u32 2147483647, %v1044
          %vm1055 = vcmp.eq.f32.partialorder %v1054, 8.507059e+37
          %v1056 = vand.u32 %v1044, 2147483648
          %v1057 = vor.u32 1.1754944e-38, %v1056
          %v1058 = vsel %vm1055, %v1057, %v1053
          %v1059 = vmul.f32 %v1033, %v1058
          %v1060 = vmul.f32 %v1035, %v1058
          %1061 = vst.msk [vmem:[%s295] sm:$0xff] %vm789, %v1059
          %1062 = vst.msk [vmem:[%s295 + $0x8] sm:$0xff] %vm789, %v1060
        $region82: #{tpu_custom_call.1} parent=69 // pred_fallthru
          _
        %p1063 = scmp.lt.s32.totalorder %s21, 1
        %s1064 = scalar_select %p1063, %s21, 1
        %s1065 = smul.addr %s1064, 2
        %s1066 = smul.addr %s1065, 8
        %s1067 = scalar_lea.vmem %s4, %s1066
        %p1068 = scmp.lt.s32.totalorder %s21, 1
        %s1069 = scalar_select %p1068, %s21, 1
        %s1070 = smul.addr %s1069, 4
        %s1071 = smul.addr %s1070, 8
        %s1072 = scalar_lea.vmem %s5, %s1071
        // Predicated region
        $region83: #{tpu_custom_call.1} parent=69 // pred_check
          %p1073 = pneg %p138
        $region84: #{tpu_custom_call.1} parent=69 // pred_check_branch
          %1075 = sbr.rel (%p1073) target = $region86
        $region85: #{tpu_custom_call.1} parent=69 // pred_region
          _
        $region86: #{tpu_custom_call.1} parent=69 // pred_fallthru
          _
        // Predicated region
        $region87: #{tpu_custom_call.1} parent=69 // pred_check
          %p1076 = pneg %p164
        $region88: #{tpu_custom_call.1} parent=69 // pred_check_branch
          %1078 = sbr.rel (%p1076) target = $region90
        $region89: #{tpu_custom_call.1} parent=69 // pred_region
          _
        $region90: #{tpu_custom_call.1} parent=69 // pred_fallthru
          _
      $region70: #{tpu_custom_call.1} parent=5 // pred_fallthru
        _
      %p1079 = scmp.le.s32.totalorder 2, %s12
      // Predicated region
      $region91: #{tpu_custom_call.1} parent=5 // pred_check
        %p1080 = pneg %p1079
      $region92: #{tpu_custom_call.1} parent=5 // pred_check_branch
        %1082 = sbr.rel (%p1080) target = $region94
      $region93: #{tpu_custom_call.1} parent=5 // pred_region
        %s1083 = ssub.s32 %s12, 2
        // Predicated region
        $region95: #{tpu_custom_call.1} parent=93 // pred_check
          %p1084 = pneg %p144
        $region96: #{tpu_custom_call.1} parent=93 // pred_check_branch
          %1086 = sbr.rel (%p1084) target = $region98
        $region97: #{tpu_custom_call.1} parent=93 // pred_region
          %p1087 = scmp.lt.s32.totalorder %s23, 1
          %s1088 = scalar_select %p1087, %s23, 1
          %s1089 = smul.addr %s1088, 2
          %s1090 = smul.addr %s1089, 8
          %s1091 = scalar_lea.vmem %s4, %s1090
        $region98: #{tpu_custom_call.1} parent=93 // pred_fallthru
          _
        // Predicated region
        $region99: #{tpu_custom_call.1} parent=93 // pred_check
          %p1092 = pneg %p170
        $region100: #{tpu_custom_call.1} parent=93 // pred_check_branch
          %1094 = sbr.rel (%p1092) target = $region102
        $region101: #{tpu_custom_call.1} parent=93 // pred_region
          %p1095 = scmp.lt.s32.totalorder %s23, 1
          %s1096 = scalar_select %p1095, %s23, 1
          %s1097 = smul.addr %s1096, 4
          %s1098 = smul.addr %s1097, 8
          %s1099 = scalar_lea.vmem %s5, %s1098
        $region102: #{tpu_custom_call.1} parent=93 // pred_fallthru
          _
      $region94: #{tpu_custom_call.1} parent=5 // pred_fallthru
        _
    $region6: #{tpu_custom_call.1} parent=1 // loop_footer
      %s16 = sadd.s32 1, %s12
    $region7: #{tpu_custom_call.1} parent=1 // loop_footer_branch
      %11 = sbr.rel target = $region3
    $region8: #{tpu_custom_call.1} parent=1 // loop_exit
      _

</llo_original>
